<compile_context>
chip_gen: v5e
topology: v5e:2x2
jax: 0.10.0
libtpu: 0.0.40
codegen_flags: <defaults>
</compile_context>

<pallas_src>
import math
from functools import partial

import numpy as np
import jax
import jax.numpy as jnp
from jax.experimental import pallas as pl
from jax.experimental.pallas import tpu as pltpu


def _mvn_nll_kernel(packed_ref, out_ref, *, p, n_low):
    """One batch tile of the fused MVN NLL partial sum.

    packed_ref : [3p+n_low, 8, TB] f32; rows = [mean(p), diag(p), lower(n_low), target(p)],
                 batch spread over (sublane, lane).
    out_ref    : [1, 8, TB] f32 per-core accumulator of (maha + logdet) per batch slot
                 (output block is resident across the inner "arbitrary" grid axis).
    """
    step = pl.program_id(1)

    @pl.when(step == 0)
    def _init():
        out_ref[...] = jnp.zeros_like(out_ref)

    t0 = 2 * p + n_low

    # Static ref slices are free views; each read is a dense [8, TB] tile.
    diag = [packed_ref[p + j] for j in range(p)]
    diff = [packed_ref[t0 + j] - packed_ref[j] for j in range(p)]   # target - mean

    # 1/diag on the EUP slot (approx) + one Newton step to recover ~f32 accuracy.
    inv_diag = []
    for d in diag:
        r = pl.reciprocal(d, approx=True)
        inv_diag.append(r * (2.0 - d * r))

    # Forward substitution z = L^{-1} (target - mean), fully unrolled (p is tiny & static).
    zs = []
    li = 0
    for j in range(p):
        a = diff[j]
        for k in range(j):
            a = a - packed_ref[2 * p + li] * zs[k]
            li += 1
        zs.append(a * inv_diag[j])

    # Mahalanobis term ||z||^2.
    maha = zs[0] * zs[0]
    for j in range(1, p):
        maha = maha + zs[j] * zs[j]

    # log|Sigma| = 2 * sum_j log(L_jj).  For tiny p use a single EUP log of the product
    # (padded slots have diag == 1 -> product == 1 -> log == 0).
    if p <= 4:
        prod = diag[0]
        for j in range(1, p):
            prod = prod * diag[j]
        logdet = 2.0 * jnp.log(prod)
    else:
        s = jnp.log(diag[0])
        for j in range(1, p):
            s = s + jnp.log(diag[j])
        logdet = 2.0 * s

    # Accumulate (maha + logdet); the -0.5 factor and the p*log(2*pi) constant are applied
    # once in the wrapper, so padded batch slots (diff = 0, diag = 1) contribute exactly 0.
    out_ref[...] = out_ref[...] + (maha + logdet)[None]


@partial(jax.jit, static_argnames=("block_b", "num_cores"))
def custom_loss(mean, scale_tril, target, *, block_b=32768, num_cores=2):
    """Pallas equivalent of CustomLoss.forward(...)['loss'].

    mean       : [B, p] f32    (py_x.mean)
    scale_tril : [B, p, p] f32 (lower-triangular Cholesky factor of py_x.covariance_matrix)
    target     : [B, p] f32    (batch[1])
    returns    : scalar f32 loss
    """
    B, p = mean.shape
    n_low = p * (p - 1) // 2
    n_rows = 3 * p + n_low

    def rup(a, m):
        return ((a + m - 1) // m) * m

    # Batch tile in batch elements; sublane-dense tiles need multiples of 8*128 = 1024.
    blk = max(1024, min(rup(block_b, 1024), rup(B, 1024)))
    n_tiles = -(-B // blk)
    cores = num_cores if n_tiles >= num_cores else 1     # v7x: shard batch over 2 TCs
    n_tiles = rup(n_tiles, cores)
    steps = n_tiles // cores
    b_pad = n_tiles * blk
    tb = blk // 8                                        # lane width per tile (mult. of 128)

    # --- build the packed slab once, in its final padded layout ---------------------
    didx = np.arange(p)
    lr, lc = np.tril_indices(p, k=-1)                    # strict lower, row-major order
    pieces = [mean.T, scale_tril[:, didx, didx].T, scale_tril[:, lr, lc].T, target.T]
    fills = [0.0, 1.0, 0.0, 0.0]                         # padded diag = 1 -> zero contribution
    pad = b_pad - B
    if pad:
        pieces = [jnp.pad(a.astype(jnp.float32), ((0, 0), (0, pad)), constant_values=f)
                  for a, f in zip(pieces, fills)]
    else:
        pieces = [a.astype(jnp.float32) for a in pieces]
    packed = jnp.concatenate(pieces, axis=0)             # [n_rows, b_pad]
    packed = packed.reshape(n_rows, 8, b_pad // 8)       # free reshape: batch -> (sublane, lane)

    part_sums = pl.pallas_call(
        partial(_mvn_nll_kernel, p=p, n_low=n_low),
        out_shape=jax.ShapeDtypeStruct((cores, 8, tb), jnp.float32),
        grid=(cores, steps),
        in_specs=[pl.BlockSpec((n_rows, 8, tb), lambda c, i: (0, 0, c * steps + i))],
        out_specs=pl.BlockSpec((1, 8, tb), lambda c, i: (c, 0, 0)),
        compiler_params=pltpu.CompilerParams(
            dimension_semantics=("parallel", "arbitrary")),
    )(packed)

    # loss = -mean(log_prob) = 0.5 * ( mean(maha + logdet) + p*log(2*pi) )
    return 0.5 * (jnp.sum(part_sums) / jnp.float32(B)
                  + jnp.float32(p * math.log(2.0 * math.pi)))


def _reference_loss(mean, scale_tril, target):
    """Plain-JAX reference matching torch.distributions.MultivariateNormal.log_prob."""
    cov = jnp.einsum("bij,bkj->bik", scale_tril, scale_tril)
    prec = jnp.linalg.inv(cov)
    diff = target - mean
    maha = jnp.einsum("bi,bij,bj->b", diff, prec, diff)
    _, logdet = jnp.linalg.slogdet(cov)
    p = mean.shape[-1]
    log_prob = -0.5 * (maha + logdet + p * math.log(2.0 * math.pi))
    return -jnp.mean(log_prob)


def _make_inputs(key, B, p):
    k_mean, k_lo, k_di, k_target, k_trans = jax.random.split(key, 5)
    mean = jax.random.normal(k_mean, (B, p), dtype=jnp.float32)
    lower = jnp.tril(jax.random.normal(k_lo, (B, p, p), dtype=jnp.float32) * 0.3, k=-1)
    diag = jnp.abs(jax.random.normal(k_di, (B, p), dtype=jnp.float32)) + 0.5
    scale_tril = lower + jax.vmap(jnp.diag)(diag)
    target = jax.random.normal(k_target, (B, p), dtype=jnp.float32)
    transients = jax.random.normal(k_trans, (B, 1, 16, 16), dtype=jnp.float32)  # plotting-only
    return mean, scale_tril, target, transients


if __name__ == "__main__":
    key = jax.random.PRNGKey(0)
    k1, k2 = jax.random.split(key)

    # Shipped shape: batch of 8 transients, event dim 3 (DM, Fluence, Width).
    B, p = 8, 3
    mean, scale_tril, target, transients = _make_inputs(k1, B, p)
    loss = jax.block_until_ready(custom_loss(mean, scale_tril, target))
    ref = jax.block_until_ready(_reference_loss(mean, scale_tril, target))
    assert jnp.isfinite(loss), "loss is not finite"
    assert jnp.allclose(loss, ref, rtol=1e-4, atol=1e-4), (loss, ref)

    # Multi-tile check: exercises the 2-core parallel axis, multi-step accumulation and
    # padded-slot handling (B=3000 with block_b=1024 -> 2 cores x 2 steps, 1096 pad slots).
    B2 = 3000
    mean2, tril2, target2, _ = _make_inputs(k2, B2, p)
    loss2 = jax.block_until_ready(custom_loss(mean2, tril2, target2, block_b=1024))
    ref2 = jax.block_until_ready(_reference_loss(mean2, tril2, target2))
    assert jnp.isfinite(loss2), "loss2 is not finite"
    assert jnp.allclose(loss2, ref2, rtol=1e-4, atol=1e-4), (loss2, ref2)

    # TODO(synk): the batch_idx == 0 branch (matplotlib figures, ZScaleInterval,
    # plt.savefig to output_folder) is host-side file I/O with no Pallas equivalent.
    print("KERNEL_OK")
</pallas_src>

<mosaic_0001>
module attributes {stable_mosaic.version = 11 : i64} {
  func.func @_mvn_nll_kernel(%arg0: i32, %arg1: i32, %arg2: memref<12x8x128xf32, #tpu.memory_space<vmem>>, %arg3: memref<1x8x128xf32, #tpu.memory_space<vmem>>) attributes {dimension_semantics = [#tpu.dimension_semantics<parallel>, #tpu.dimension_semantics<arbitrary>], iteration_bounds = array<i64: 1, 1>, scalar_prefetch = 0 : i64, scratch_operands = 0 : i64, tpu.core_type = #tpu.core_type<tc>, window_params = [{transform_indices = @transform_0, window_bounds = array<i64: 12, 8, 128>}, {transform_indices = @transform_1, window_bounds = array<i64: 1, 8, 128>}]} {
    %c0_i32 = arith.constant 0 : i32
    %0 = arith.cmpi eq, %arg1, %c0_i32 : i32
    %1 = arith.extui %0 : i1 to i32
    %c0_i32_0 = arith.constant 0 : i32
    %2 = arith.cmpi ne, %1, %c0_i32_0 : i32
    scf.if %2 {
      %cst_34 = arith.constant 0.000000e+00 : f32
      %69 = vector.broadcast %cst_34 : f32 to vector<1x8x128xf32>
      %c0_35 = arith.constant 0 : index
      %c0_36 = arith.constant 0 : index
      %c0_37 = arith.constant 0 : index
      %70 = vector.load %arg3[%c0_35, %c0_36, %c0_37] : memref<1x8x128xf32, #tpu.memory_space<vmem>>, vector<1x8x128xf32>
      tpu.vector_store %arg3[%c0_35, %c0_36, %c0_37], %69 {strides = array<i32>} : memref<1x8x128xf32, #tpu.memory_space<vmem>>, vector<1x8x128xf32>,
    } else {
    }
    %c3 = arith.constant 3 : index
    %c0 = arith.constant 0 : index
    %c0_1 = arith.constant 0 : index
    %3 = vector.load %arg2[%c3, %c0, %c0_1] : memref<12x8x128xf32, #tpu.memory_space<vmem>>, vector<1x8x128xf32>
    %4 = vector.shape_cast %3 : vector<1x8x128xf32> to vector<8x128xf32>
    %c4 = arith.constant 4 : index
    %c0_2 = arith.constant 0 : index
    %c0_3 = arith.constant 0 : index
    %5 = vector.load %arg2[%c4, %c0_2, %c0_3] : memref<12x8x128xf32, #tpu.memory_space<vmem>>, vector<1x8x128xf32>
    %6 = vector.shape_cast %5 : vector<1x8x128xf32> to vector<8x128xf32>
    %c5 = arith.constant 5 : index
    %c0_4 = arith.constant 0 : index
    %c0_5 = arith.constant 0 : index
    %7 = vector.load %arg2[%c5, %c0_4, %c0_5] : memref<12x8x128xf32, #tpu.memory_space<vmem>>, vector<1x8x128xf32>
    %8 = vector.shape_cast %7 : vector<1x8x128xf32> to vector<8x128xf32>
    %c9 = arith.constant 9 : index
    %c0_6 = arith.constant 0 : index
    %c0_7 = arith.constant 0 : index
    %9 = vector.load %arg2[%c9, %c0_6, %c0_7] : memref<12x8x128xf32, #tpu.memory_space<vmem>>, vector<1x8x128xf32>
    %10 = vector.shape_cast %9 : vector<1x8x128xf32> to vector<8x128xf32>
    %c0_8 = arith.constant 0 : index
    %c0_9 = arith.constant 0 : index
    %c0_10 = arith.constant 0 : index
    %11 = vector.load %arg2[%c0_8, %c0_9, %c0_10] : memref<12x8x128xf32, #tpu.memory_space<vmem>>, vector<1x8x128xf32>
    %12 = vector.shape_cast %11 : vector<1x8x128xf32> to vector<8x128xf32>
    %13 = arith.subf %10, %12 : vector<8x128xf32>
    %c10 = arith.constant 10 : index
    %c0_11 = arith.constant 0 : index
    %c0_12 = arith.constant 0 : index
    %14 = vector.load %arg2[%c10, %c0_11, %c0_12] : memref<12x8x128xf32, #tpu.memory_space<vmem>>, vector<1x8x128xf32>
    %15 = vector.shape_cast %14 : vector<1x8x128xf32> to vector<8x128xf32>
    %c1 = arith.constant 1 : index
    %c0_13 = arith.constant 0 : index
    %c0_14 = arith.constant 0 : index
    %16 = vector.load %arg2[%c1, %c0_13, %c0_14] : memref<12x8x128xf32, #tpu.memory_space<vmem>>, vector<1x8x128xf32>
    %17 = vector.shape_cast %16 : vector<1x8x128xf32> to vector<8x128xf32>
    %18 = arith.subf %15, %17 : vector<8x128xf32>
    %c11 = arith.constant 11 : index
    %c0_15 = arith.constant 0 : index
    %c0_16 = arith.constant 0 : index
    %19 = vector.load %arg2[%c11, %c0_15, %c0_16] : memref<12x8x128xf32, #tpu.memory_space<vmem>>, vector<1x8x128xf32>
    %20 = vector.shape_cast %19 : vector<1x8x128xf32> to vector<8x128xf32>
    %c2 = arith.constant 2 : index
    %c0_17 = arith.constant 0 : index
    %c0_18 = arith.constant 0 : index
    %21 = vector.load %arg2[%c2, %c0_17, %c0_18] : memref<12x8x128xf32, #tpu.memory_space<vmem>>, vector<1x8x128xf32>
    %22 = vector.shape_cast %21 : vector<1x8x128xf32> to vector<8x128xf32>
    %23 = arith.subf %20, %22 : vector<8x128xf32>
    %24 = tpu.reciprocal %4 {approx = true} : vector<8x128xf32> -> vector<8x128xf32>
    %25 = arith.mulf %4, %24 : vector<8x128xf32>
    %cst = arith.constant 2.000000e+00 : f32
    %26 = vector.broadcast %cst : f32 to vector<8x128xf32>
    %27 = arith.subf %26, %25 : vector<8x128xf32>
    %28 = arith.mulf %24, %27 : vector<8x128xf32>
    %29 = tpu.reciprocal %6 {approx = true} : vector<8x128xf32> -> vector<8x128xf32>
    %30 = arith.mulf %6, %29 : vector<8x128xf32>
    %cst_19 = arith.constant 2.000000e+00 : f32
    %31 = vector.broadcast %cst_19 : f32 to vector<8x128xf32>
    %32 = arith.subf %31, %30 : vector<8x128xf32>
    %33 = arith.mulf %29, %32 : vector<8x128xf32>
    %34 = tpu.reciprocal %8 {approx = true} : vector<8x128xf32> -> vector<8x128xf32>
    %35 = arith.mulf %8, %34 : vector<8x128xf32>
    %cst_20 = arith.constant 2.000000e+00 : f32
    %36 = vector.broadcast %cst_20 : f32 to vector<8x128xf32>
    %37 = arith.subf %36, %35 : vector<8x128xf32>
    %38 = arith.mulf %34, %37 : vector<8x128xf32>
    %39 = arith.mulf %13, %28 : vector<8x128xf32>
    %c6 = arith.constant 6 : index
    %c0_21 = arith.constant 0 : index
    %c0_22 = arith.constant 0 : index
    %40 = vector.load %arg2[%c6, %c0_21, %c0_22] : memref<12x8x128xf32, #tpu.memory_space<vmem>>, vector<1x8x128xf32>
    %41 = vector.shape_cast %40 : vector<1x8x128xf32> to vector<8x128xf32>
    %42 = arith.mulf %41, %39 : vector<8x128xf32>
    %43 = arith.subf %18, %42 : vector<8x128xf32>
    %44 = arith.mulf %43, %33 : vector<8x128xf32>
    %c7 = arith.constant 7 : index
    %c0_23 = arith.constant 0 : index
    %c0_24 = arith.constant 0 : index
    %45 = vector.load %arg2[%c7, %c0_23, %c0_24] : memref<12x8x128xf32, #tpu.memory_space<vmem>>, vector<1x8x128xf32>
    %46 = vector.shape_cast %45 : vector<1x8x128xf32> to vector<8x128xf32>
    %47 = arith.mulf %46, %39 : vector<8x128xf32>
    %48 = arith.subf %23, %47 : vector<8x128xf32>
    %c8 = arith.constant 8 : index
    %c0_25 = arith.constant 0 : index
    %c0_26 = arith.constant 0 : index
    %49 = vector.load %arg2[%c8, %c0_25, %c0_26] : memref<12x8x128xf32, #tpu.memory_space<vmem>>, vector<1x8x128xf32>
    %50 = vector.shape_cast %49 : vector<1x8x128xf32> to vector<8x128xf32>
    %51 = arith.mulf %50, %44 : vector<8x128xf32>
    %52 = arith.subf %48, %51 : vector<8x128xf32>
    %53 = arith.mulf %52, %38 : vector<8x128xf32>
    %54 = arith.mulf %39, %39 : vector<8x128xf32>
    %55 = arith.mulf %44, %44 : vector<8x128xf32>
    %56 = arith.addf %54, %55 : vector<8x128xf32>
    %57 = arith.mulf %53, %53 : vector<8x128xf32>
    %58 = arith.addf %56, %57 : vector<8x128xf32>
    %59 = arith.mulf %4, %6 : vector<8x128xf32>
    %60 = arith.mulf %59, %8 : vector<8x128xf32>
    %61 = math.log %60 : vector<8x128xf32>
    %cst_27 = arith.constant 2.000000e+00 : f32
    %62 = vector.broadcast %cst_27 : f32 to vector<8x128xf32>
    %63 = arith.mulf %62, %61 : vector<8x128xf32>
    %c0_28 = arith.constant 0 : index
    %c0_29 = arith.constant 0 : index
    %c0_30 = arith.constant 0 : index
    %64 = vector.load %arg3[%c0_28, %c0_29, %c0_30] : memref<1x8x128xf32, #tpu.memory_space<vmem>>, vector<1x8x128xf32>
    %65 = arith.addf %58, %63 : vector<8x128xf32>
    %66 = vector.shape_cast %65 : vector<8x128xf32> to vector<1x8x128xf32>
    %67 = arith.addf %64, %66 : vector<1x8x128xf32>
    %c0_31 = arith.constant 0 : index
    %c0_32 = arith.constant 0 : index
    %c0_33 = arith.constant 0 : index
    %68 = vector.load %arg3[%c0_31, %c0_32, %c0_33] : memref<1x8x128xf32, #tpu.memory_space<vmem>>, vector<1x8x128xf32>
    tpu.vector_store %arg3[%c0_31, %c0_32, %c0_33], %67 {strides = array<i32>} : memref<1x8x128xf32, #tpu.memory_space<vmem>>, vector<1x8x128xf32>,
    return
  }
  func.func @transform_0(%arg0: i32, %arg1: i32) -> (i32, i32, i32) {
    %c1_i32 = arith.constant 1 : i32
    %0 = arith.muli %arg0, %c1_i32 : i32
    %1 = arith.addi %0, %arg1 : i32
    %c0_i32 = arith.constant 0 : i32
    %c0_i32_0 = arith.constant 0 : i32
    %c0_i32_1 = arith.constant 0 : i32
    return %c0_i32, %c0_i32_0, %1 : i32, i32, i32
  }
  func.func @transform_1(%arg0: i32, %arg1: i32) -> (i32, i32, i32) {
    %c0_i32 = arith.constant 0 : i32
    %c0_i32_0 = arith.constant 0 : i32
    %c0_i32_1 = arith.constant 0 : i32
    return %arg0, %c0_i32, %c0_i32_0 : i32, i32, i32
  }
}

</mosaic_0001>

<llo_original>
// kernel: custom_loss.1
$region0: #{custom_loss.1}
  #allocation0 [shape = 'u32[]', space=smem, size = 0x4, offset = 0x4, fixed_abs, tag = 'smem constant byte address 0x4 - core index']
  #allocation1 [shape = 'u32[72,128]{1,0:T(1,128)}', space=vmem, size = 0x9000, scoped, tag = 'internal scratch']
  %s0 = inlined_call_operand.vmem [shape: f32[12,8,128], index: 0, kind: input, shape index: {}]
  %s1 = inlined_call_operand.vmem [shape: f32[1,8,128], index: 1, kind: output, shape index: {}]
  %s2 = sld [smem:[#allocation0]]
  $region18: #{custom_loss.1} parent=0
    _
  %s4 = ssub.s32 1, %s2
  %s5 = scalar_select 0, %s4, %s2
  // Predicated region
  $region2: #{custom_loss.1} parent=0 // pred_check
    _
  $region3: #{custom_loss.1} parent=0 // pred_check_branch
    %7 = sbr.rel (0) target = $region5
  $region4: #{custom_loss.1} parent=0 // pred_region
    %s8 = sadd.s32 0, 0
    %p9 = scmp.lt.s32.totalorder %s8, 0
    %s10 = scalar_select %p9, %s8, 0
    %s11 = smul.addr %s10, 8
    %s12 = scalar_lea.vmem %s0, %s11
    %s13 = sadd.s32 0, 0
  $region5: #{custom_loss.1} parent=0 // pred_fallthru
    _
  %s14 = sadd.s32 0, 0
  %p15 = scmp.lt.s32.totalorder %s14, 0
  %s16 = scalar_select %p15, %s14, 0
  %s17 = smul.addr %s16, 8
  %s18 = scalar_lea.vmem %s0, %s17
  %s19 = sadd.s32 0, 0
  %p20 = scmp.lt.s32.totalorder %s19, 0
  %s21 = scalar_select %p20, %s19, 0
  %s22 = smul.addr %s21, 8
  %s23 = scalar_lea.vmem %s0, %s22
  %s24 = sadd.s32 0, 0
  %p25 = scmp.eq.s32.totalorder 0, 0
  // Predicated region
  $region6: #{custom_loss.1} parent=0 // pred_check
    %p26 = pneg %p25
  $region7: #{custom_loss.1} parent=0 // pred_check_branch
    %28 = sbr.rel (%p26) target = $region9
  $region8: #{custom_loss.1} parent=0 // pred_region
    %29 = vst [vmem:[%s1] sm:$0xff] 0.0
  $region9: #{custom_loss.1} parent=0 // pred_fallthru
    _
  %s30 = scalar_lea.vmem %s23, 24
  %v31 = vld [vmem:[%s30] sm:$0xff]
  %s32 = scalar_lea.vmem %s23, 32
  %v33 = vld [vmem:[%s32] sm:$0xff]
  %s34 = scalar_lea.vmem %s23, 40
  %v35 = vld [vmem:[%s34] sm:$0xff]
  %s36 = scalar_lea.vmem %s23, 72
  %v37 = vld [vmem:[%s36] sm:$0xff]
  %v38 = vld [vmem:[%s23] sm:$0xff]
  %v39 = vsub.f32 %v37, %v38
  %s40 = scalar_lea.vmem %s23, 80
  %v41 = vld [vmem:[%s40] sm:$0xff]
  %s42 = scalar_lea.vmem %s23, 8
  %v43 = vld [vmem:[%s42] sm:$0xff]
  %v44 = vsub.f32 %v41, %v43
  %s45 = scalar_lea.vmem %s23, 88
  %v46 = vld [vmem:[%s45] sm:$0xff]
  %s47 = scalar_lea.vmem %s23, 16
  %v48 = vld [vmem:[%s47] sm:$0xff]
  %v49 = vsub.f32 %v46, %v48
  %v50 = vrcp.pop %v31
  %v51 = vmul.f32 %v31, %v50
  %v52 = vsub.f32 2.0, %v51
  %v53 = vmul.f32 %v50, %v52
  %v54 = vrcp.pop %v33
  %v55 = vmul.f32 %v33, %v54
  %v56 = vsub.f32 2.0, %v55
  %v57 = vmul.f32 %v54, %v56
  %v58 = vrcp.pop %v35
  %v59 = vmul.f32 %v35, %v58
  %v60 = vsub.f32 2.0, %v59
  %v61 = vmul.f32 %v58, %v60
  %v62 = vmul.f32 %v39, %v53
  %s63 = scalar_lea.vmem %s23, 48
  %v64 = vld [vmem:[%s63] sm:$0xff]
  %v65 = vmul.f32 %v64, %v62
  %v66 = vsub.f32 %v44, %v65
  %v67 = vmul.f32 %v66, %v57
  %s68 = scalar_lea.vmem %s23, 56
  %v69 = vld [vmem:[%s68] sm:$0xff]
  %v70 = vmul.f32 %v69, %v62
  %v71 = vsub.f32 %v49, %v70
  %s72 = scalar_lea.vmem %s23, 64
  %v73 = vld [vmem:[%s72] sm:$0xff]
  %v74 = vmul.f32 %v73, %v67
  %v75 = vsub.f32 %v71, %v74
  %v76 = vmul.f32 %v75, %v61
  %v77 = vmul.f32 %v62, %v62
  %v78 = vmul.f32 %v67, %v67
  %v79 = vadd.f32 %v77, %v78
  %v80 = vmul.f32 %v76, %v76
  %v81 = vadd.f32 %v79, %v80
  %v82 = vmul.f32 %v31, %v33
  %v83 = vmul.f32 %v82, %v35
  %v84 = vlog2.pop %v83
  %v85 = vmul.f32 %v84, 0.6931472
  %v86 = vmul.f32 %v85, 2.0
  %v87 = vld [vmem:[%s1] sm:$0xff]
  %v88 = vadd.f32 %v81, %v86
  %v89 = vadd.f32 %v87, %v88
  %90 = vst [vmem:[%s1] sm:$0xff] %v89
  // Predicated region
  $region10: #{custom_loss.1} parent=0 // pred_check
    _
  $region11: #{custom_loss.1} parent=0 // pred_check_branch
    %92 = sbr.rel (0) target = $region13
  $region12: #{custom_loss.1} parent=0 // pred_region
    _
  $region13: #{custom_loss.1} parent=0 // pred_fallthru
    _
  // Predicated region
  $region14: #{custom_loss.1} parent=0 // pred_check
    _
  $region15: #{custom_loss.1} parent=0 // pred_check_branch
    %94 = sbr.rel (0) target = $region17
  $region16: #{custom_loss.1} parent=0 // pred_region
    _
  $region17: #{custom_loss.1} parent=0 // pred_fallthru
    _

</llo_original>
